<compile_context>
chip_gen: v5e
topology: v5e:2x2
jax: 0.10.0
libtpu: 0.0.40
codegen_flags: <defaults>
</compile_context>

<pallas_src>
import jax
import jax.numpy as jnp
from jax.experimental import pallas as pl
from jax.experimental.pallas import tpu as pltpu

# ----------------------------- configuration (small, synthetic) ---------------
NRES = 3       # number of residual Linear(W, W) layers constructed (nres >= 2)
WIDTH = 32     # hidden width
NEX = 8        # number of samples (= in-features of the final Linear)
HEADER = 8     # sublane-aligned header rows in the packed parameter slab


# ----------------------------- Pallas kernel ----------------------------------
def wasserstein_kernel(xw_ref, p_ref, out_ref):
    # xw_ref : (NEX, 2)                   VMEM   col 0 = x, col 1 = wl
    # p_ref  : (HEADER + (NRES-1)*W, W)   VMEM
    #          header rows: 0 w0 | 1 b0 | 2 wo^T | 3 [bo, bl, 0..] | 4.. bm[i]
    #          rows HEADER + i*W .. : residual weight W_i (tile-aligned slices)
    # out_ref: (1, 1)                     VMEM
    xw = xw_ref[...]                      # (NEX, 2)
    x = xw[:, 0:1]                        # (NEX, 1)
    wl = xw[:, 1:2]                       # (NEX, 1)

    header = p_ref[0:HEADER, :]           # (8, W) static slice
    w0 = header[0:1, :]                   # (1, W)
    b0 = header[1:2, :]                   # (1, W)
    wo_t = header[2:3, :]                 # (1, W)
    bo = header[3:4, 0:1]                 # (1, 1)
    bl = header[3:4, 1:2]                 # (1, 1)

    # layer 0: Linear(1, W) + ReLU as a VPU outer-product broadcast (no MXU).
    h = jnp.maximum(x * w0 + b0, 0.0)     # (NEX, W)

    # residual blocks: h = h + relu(h @ Wi + bi), i = 1 .. nres-1 (static unroll)
    for i in range(NRES - 1):
        start = HEADER + i * WIDTH
        wi = p_ref[start:start + WIDTH, :]        # (W, W), 8-row aligned view
        bi = header[4 + i:5 + i, :]               # (1, W) sublane broadcast
        h = h + jnp.maximum(
            jnp.dot(h, wi, preferred_element_type=jnp.float32) + bi,
            0.0,
        )

    # Fused tail (no MXU):
    #   out = sum_k wo[k] * (sum_j wl[j] * h[j,k]) + (bo*sum(wl) + bl)
    g = jnp.sum(h * wl, axis=0, keepdims=True)          # (1, W) sublane reduce
    out = jnp.sum(g * wo_t, axis=-1, keepdims=True)     # (1, 1) lane reduce
    c = bo * jnp.sum(wl, axis=0, keepdims=True) + bl    # (1, 1), in-kernel fold
    out_ref[...] = out + c


# ----------------------------- one-time parameter packing ---------------------
def pack_params(params):
    """Done ONCE at init; removes all per-call packing HLOs from the forward."""
    (w0, b0, wm, bm, wo, bo, wl, bl) = params
    header = jnp.zeros((HEADER, WIDTH), jnp.float32)
    header = header.at[0, :].set(w0[0])               # w0
    header = header.at[1, :].set(b0[0])               # b0
    header = header.at[2, :].set(wo[:, 0])            # wo^T
    header = header.at[3, 0].set(bo[0, 0])            # bo
    header = header.at[3, 1].set(bl[0, 0])            # bl
    header = header.at[4:4 + (NRES - 1), :].set(bm)   # residual biases
    wm_flat = wm.reshape((NRES - 1) * WIDTH, WIDTH)   # each Wi starts at row 8*k
    packed = jnp.concatenate([header, wm_flat], axis=0)
    return packed, wl


# ----------------------------- jitted forward ----------------------------------
@jax.jit
def wasserstein_forward(x, packed_params):
    packed, wl = packed_params
    xw = jnp.concatenate([x, wl], axis=1)             # (NEX, 2) single fused op
    vmem = pl.BlockSpec(memory_space=pltpu.MemorySpace.VMEM)
    return pl.pallas_call(
        wasserstein_kernel,
        out_shape=jax.ShapeDtypeStruct((1, 1), jnp.float32),
        in_specs=[vmem, vmem],
        out_specs=vmem,
    )(xw, packed)


# ----------------------------- deterministic parameter init -------------------
def init_params(key):
    ks = jax.random.split(key, 8)
    scale = 0.1
    # weights stored (in, out) so every layer is x @ W + b
    w0 = scale * jax.random.normal(ks[0], (1, WIDTH), jnp.float32)
    b0 = scale * jax.random.normal(ks[1], (1, WIDTH), jnp.float32)
    # only layers 1..nres-1 are used in forward -> NRES-1 middle weight sets
    wm = scale * jax.random.normal(ks[2], (NRES - 1, WIDTH, WIDTH), jnp.float32)
    bm = scale * jax.random.normal(ks[3], (NRES - 1, WIDTH), jnp.float32)
    wo = scale * jax.random.normal(ks[4], (WIDTH, 1), jnp.float32)
    bo = scale * jax.random.normal(ks[5], (1, 1), jnp.float32)
    wl = scale * jax.random.normal(ks[6], (NEX, 1), jnp.float32)
    bl = scale * jax.random.normal(ks[7], (1, 1), jnp.float32)
    return (w0, b0, wm, bm, wo, bo, wl, bl)


def reference_forward(x, params):
    (w0, b0, wm, bm, wo, bo, wl, bl) = params
    h = jnp.maximum(x @ w0 + b0, 0.0)
    for i in range(NRES - 1):
        h = h + jnp.maximum(h @ wm[i] + bm[i], 0.0)
    y = h @ wo + bo                      # (NEX, 1)
    y = jnp.reshape(y, (1, -1))          # (1, NEX)
    return y @ wl + bl                   # (1, 1)


if __name__ == "__main__":
    assert NRES >= 2, "forward uses layers 1..nres-1; need at least one residual layer"
    key = jax.random.PRNGKey(0)
    kx, kp = jax.random.split(key)
    x = jax.random.normal(kx, (NEX, 1), jnp.float32)
    params = init_params(kp)
    packed_params = jax.block_until_ready(pack_params(params))  # one-time pack

    out = jax.block_until_ready(wasserstein_forward(x, packed_params))
    ref = jax.block_until_ready(reference_forward(x, params))

    assert out.shape == (1, 1)
    assert jnp.allclose(out, ref, atol=1e-5, rtol=1e-4), (out, ref)
    print("KERNEL_OK")
</pallas_src>

<mosaic_0001>
module attributes {stable_mosaic.version = 11 : i64} {
  func.func @wasserstein_kernel(%arg0: memref<8x2xf32, #tpu.memory_space<vmem>>, %arg1: memref<72x32xf32, #tpu.memory_space<vmem>>, %arg2: memref<1x1xf32, #tpu.memory_space<vmem>>) attributes {dimension_semantics = [], scalar_prefetch = 0 : i64, scratch_operands = 0 : i64, tpu.core_type = #tpu.core_type<tc>} {
    %c0 = arith.constant 0 : index
    %c0_0 = arith.constant 0 : index
    %0 = vector.load %arg0[%c0, %c0_0] : memref<8x2xf32, #tpu.memory_space<vmem>>, vector<8x2xf32>
    %1 = vector.extract_strided_slice %0 {offsets = [0, 0], sizes = [8, 1], strides = [1, 1]} : vector<8x2xf32> to vector<8x1xf32>
    %2 = vector.extract_strided_slice %0 {offsets = [0, 1], sizes = [8, 1], strides = [1, 1]} : vector<8x2xf32> to vector<8x1xf32>
    %c0_1 = arith.constant 0 : index
    %c0_2 = arith.constant 0 : index
    %3 = vector.load %arg1[%c0_1, %c0_2] : memref<72x32xf32, #tpu.memory_space<vmem>>, vector<8x32xf32>
    %4 = vector.extract_strided_slice %3 {offsets = [0, 0], sizes = [1, 32], strides = [1, 1]} : vector<8x32xf32> to vector<1x32xf32>
    %5 = vector.extract_strided_slice %3 {offsets = [1, 0], sizes = [1, 32], strides = [1, 1]} : vector<8x32xf32> to vector<1x32xf32>
    %6 = vector.extract_strided_slice %3 {offsets = [2, 0], sizes = [1, 32], strides = [1, 1]} : vector<8x32xf32> to vector<1x32xf32>
    %7 = vector.extract_strided_slice %3 {offsets = [3, 0], sizes = [1, 1], strides = [1, 1]} : vector<8x32xf32> to vector<1x1xf32>
    %8 = vector.extract_strided_slice %3 {offsets = [3, 1], sizes = [1, 1], strides = [1, 1]} : vector<8x32xf32> to vector<1x1xf32>
    %9 = vector.broadcast %1 : vector<8x1xf32> to vector<8x32xf32>
    %10 = vector.broadcast %4 : vector<1x32xf32> to vector<8x32xf32>
    %11 = arith.mulf %9, %10 : vector<8x32xf32>
    %12 = vector.broadcast %5 : vector<1x32xf32> to vector<8x32xf32>
    %13 = arith.addf %11, %12 : vector<8x32xf32>
    %cst = arith.constant 0.000000e+00 : f32
    %14 = vector.broadcast %cst : f32 to vector<8x32xf32>
    %15 = arith.maximumf %13, %14 : vector<8x32xf32>
    %c8 = arith.constant 8 : index
    %c0_3 = arith.constant 0 : index
    %16 = vector.load %arg1[%c8, %c0_3] : memref<72x32xf32, #tpu.memory_space<vmem>>, vector<32x32xf32>
    %17 = vector.extract_strided_slice %3 {offsets = [4, 0], sizes = [1, 32], strides = [1, 1]} : vector<8x32xf32> to vector<1x32xf32>
    %cst_4 = arith.constant dense<0.000000e+00> : vector<8x32xf32>
    %18 = tpu.matmul %15, %16, %cst_4 {dimension_numbers = #tpu.dot_dimension_numbers<[1], [0], [0], [1], [0, 0, 1, 1], [], []>} : vector<8x32xf32>, vector<32x32xf32>, vector<8x32xf32> -> vector<8x32xf32>
    %19 = vector.broadcast %17 : vector<1x32xf32> to vector<8x32xf32>
    %20 = arith.addf %18, %19 : vector<8x32xf32>
    %cst_5 = arith.constant 0.000000e+00 : f32
    %21 = vector.broadcast %cst_5 : f32 to vector<8x32xf32>
    %22 = arith.maximumf %20, %21 : vector<8x32xf32>
    %23 = arith.addf %15, %22 : vector<8x32xf32>
    %c40 = arith.constant 40 : index
    %c0_6 = arith.constant 0 : index
    %24 = vector.load %arg1[%c40, %c0_6] : memref<72x32xf32, #tpu.memory_space<vmem>>, vector<32x32xf32>
    %25 = vector.extract_strided_slice %3 {offsets = [5, 0], sizes = [1, 32], strides = [1, 1]} : vector<8x32xf32> to vector<1x32xf32>
    %cst_7 = arith.constant dense<0.000000e+00> : vector<8x32xf32>
    %26 = tpu.matmul %23, %24, %cst_7 {dimension_numbers = #tpu.dot_dimension_numbers<[1], [0], [0], [1], [0, 0, 1, 1], [], []>} : vector<8x32xf32>, vector<32x32xf32>, vector<8x32xf32> -> vector<8x32xf32>
    %27 = vector.broadcast %25 : vector<1x32xf32> to vector<8x32xf32>
    %28 = arith.addf %26, %27 : vector<8x32xf32>
    %cst_8 = arith.constant 0.000000e+00 : f32
    %29 = vector.broadcast %cst_8 : f32 to vector<8x32xf32>
    %30 = arith.maximumf %28, %29 : vector<8x32xf32>
    %31 = arith.addf %23, %30 : vector<8x32xf32>
    %32 = vector.broadcast %2 : vector<8x1xf32> to vector<8x32xf32>
    %33 = arith.mulf %31, %32 : vector<8x32xf32>
    %cst_9 = arith.constant dense<0.000000e+00> : vector<32xf32>
    %34 = vector.multi_reduction <add>, %33, %cst_9 [0] : vector<8x32xf32> to vector<32xf32>
    %35 = vector.shape_cast %34 : vector<32xf32> to vector<1x32xf32>
    %36 = arith.mulf %35, %6 : vector<1x32xf32>
    %cst_10 = arith.constant dense<0.000000e+00> : vector<1xf32>
    %37 = vector.multi_reduction <add>, %36, %cst_10 [1] : vector<1x32xf32> to vector<1xf32>
    %38 = vector.shape_cast %37 : vector<1xf32> to vector<1x1xf32>
    %cst_11 = arith.constant dense<0.000000e+00> : vector<1xf32>
    %39 = vector.multi_reduction <add>, %2, %cst_11 [0] : vector<8x1xf32> to vector<1xf32>
    %40 = vector.shape_cast %39 : vector<1xf32> to vector<1x1xf32>
    %41 = arith.mulf %7, %40 : vector<1x1xf32>
    %42 = arith.addf %41, %8 : vector<1x1xf32>
    %43 = arith.addf %38, %42 : vector<1x1xf32>
    %c0_12 = arith.constant 0 : index
    %c0_13 = arith.constant 0 : index
    %44 = vector.load %arg2[%c0_12, %c0_13] : memref<1x1xf32, #tpu.memory_space<vmem>>, vector<1x1xf32>
    tpu.vector_store %arg2[%c0_12, %c0_13], %43 {strides = array<i32>} : memref<1x1xf32, #tpu.memory_space<vmem>>, vector<1x1xf32>,
    return
  }
}

</mosaic_0001>

<llo_original>
// kernel: wasserstein_forward.1
$region0: #{wasserstein_forward.1}
  #allocation0 [shape = 'u32[]', space=smem, size = 0x4, offset = 0x4, fixed_abs, tag = 'smem constant byte address 0x4 - core index']
  #allocation1 [shape = 'u32[72,128]{1,0:T(1,128)}', space=vmem, size = 0x9000, scoped, tag = 'internal scratch']
  %s0 = inlined_call_operand.vmem [shape: f32[8,2], index: 0, kind: input, shape index: {}]
  %s1 = inlined_call_operand.vmem [shape: f32[72,32], index: 1, kind: input, shape index: {}]
  %s2 = inlined_call_operand.hbm [shape: f32[1,1], index: 2, kind: output, shape index: {}]
  %s3 = sld [smem:[#allocation0]]
  $region18: #{wasserstein_forward.1} parent=0
    _
  %s5 = ssub.s32 1, %s3
  %s6 = scalar_select 0, %s5, %s3
  $region1: #{wasserstein_forward.1} parent=0
    #allocation2 [shape = 'u8[512]{0}', space=vmem, size = 0x400, scoped, tag = 'output window, operand 0, single buffered']
    #allocation3 [shape = 's32[1]{0}', space=sflag, size = 0x4, scoped, tag = 'scoped memory for wasserstein_forward.1']
    %7 = vsyncpa [#allocation3], 0
    // Predicated region
    $region2: #{wasserstein_forward.1} parent=1 // pred_check
      _
    $region3: #{wasserstein_forward.1} parent=1 // pred_check_branch
      %9 = sbr.rel (0) target = $region5
    $region4: #{wasserstein_forward.1} parent=1 // pred_region
      _
    $region5: #{wasserstein_forward.1} parent=1 // pred_fallthru
      _
    // Predicated region
    $region6: #{wasserstein_forward.1} parent=1 // pred_check
      _
    $region7: #{wasserstein_forward.1} parent=1 // pred_check_branch
      %11 = sbr.rel (0) target = $region9
    $region8: #{wasserstein_forward.1} parent=1 // pred_region
      _
    $region9: #{wasserstein_forward.1} parent=1 // pred_fallthru
      _
    %v12 = vld [vmem:[%s0] sm:$0xff]
    %v13 = vld [vmem:[%s1] sm:$0xff]
    %15 = vset.pattern.permute.xlu0 0
    %16 = vperm.xlu0 %15, %v12
    %v17 = vpop.permute.xlu0 %16
    %v19 = vperm.slane %v13, 0
    %v20 = vmul.f32 %v17, %v19
    %v21 = vperm.slane %v13, 1
    %v22 = vadd.f32 %v20, %v21
    %v23 = vmax.f32 %v22, 0.0
    %v24 = vld [vmem:[%s1 + $0x8] sm:$0xff]
    %v25 = vld [vmem:[%s1 + $0x10] sm:$0xff]
    %v26 = vld [vmem:[%s1 + $0x18] sm:$0xff]
    %v27 = vld [vmem:[%s1 + $0x20] sm:$0xff]
    %v28 = vperm.slane %v13, 4
    %vm29 = vcmask 261120
    %v31 = vsel %vm29, %v23, 0
    %33 = vmatpush.msra.mxu0 0.0
    %34 = vmatpush.msra.mxu0 0.0
    %35 = vmatpush.msra.mxu0 0.0
    %36 = vmatpush.msra.mxu0 0.0
    %37 = vmatpush.msra.mxu0 0.0
    %38 = vmatpush.msra.mxu0 0.0
    %39 = vmatpush.msra.mxu0 0.0
    %40 = vmatpush.msra.mxu0 0.0
    %41 = vmatpush.msra.mxu0 0.0
    %42 = vmatpush.msra.mxu0 0.0
    %43 = vmatpush.msra.mxu0 0.0
    %44 = vmatpush.msra.mxu0 0.0
    %45 = vmatpush.msra.mxu0 %v27
    %46 = vmatpush.msra.mxu0 %v26
    %47 = vmatpush.msra.mxu0 %v25
    %48 = vmatpush.msra.mxu0 %v24
    %49 = vmatmul.f32.gmra.mxu0 %v31
    %v50 = vpop.f32.mrf.mxu0
    %v51 = vadd.f32 %v28, %v50
    %52 = vdwg.mxu0
    %v53 = vmax.f32 %v51, 0.0
    %v54 = vadd.f32 %v23, %v53
    %v55 = vld [vmem:[%s1 + $0x28] sm:$0xff]
    %v56 = vld [vmem:[%s1 + $0x30] sm:$0xff]
    %v57 = vld [vmem:[%s1 + $0x38] sm:$0xff]
    %v58 = vld [vmem:[%s1 + $0x40] sm:$0xff]
    %v59 = vperm.slane %v13, 5
    %v61 = vsel %vm29, %v54, 0
    %63 = vmatpush.msra.mxu0 0.0
    %64 = vmatpush.msra.mxu0 0.0
    %65 = vmatpush.msra.mxu0 0.0
    %66 = vmatpush.msra.mxu0 0.0
    %67 = vmatpush.msra.mxu0 0.0
    %68 = vmatpush.msra.mxu0 0.0
    %69 = vmatpush.msra.mxu0 0.0
    %70 = vmatpush.msra.mxu0 0.0
    %71 = vmatpush.msra.mxu0 0.0
    %72 = vmatpush.msra.mxu0 0.0
    %73 = vmatpush.msra.mxu0 0.0
    %74 = vmatpush.msra.mxu0 0.0
    %75 = vmatpush.msra.mxu0 %v58
    %76 = vmatpush.msra.mxu0 %v57
    %77 = vmatpush.msra.mxu0 %v56
    %78 = vmatpush.msra.mxu0 %v55
    %79 = vmatmul.f32.gmra.mxu0 %v61
    %v80 = vpop.f32.mrf.mxu0
    %v81 = vadd.f32 %v59, %v80
    %82 = vdwg.mxu0
    %v83 = vmax.f32 %v81, 0.0
    %v84 = vadd.f32 %v54, %v83
    %85 = vset.pattern.permute.xlu0 1
    %86 = vperm.xlu0 %85, %v12
    %v87 = vpop.permute.xlu0 %86
    %v89 = vmul.f32 %v84, %v87
    %v90 = vsel %vm29, %v89, 0.0
    %v91 = vrot.slane %v90, 4
    %v92 = vadd.f32 %v90, %v91
    %v93 = vrot.slane %v92, 2
    %v94 = vadd.f32 %v92, %v93
    %v95 = vrot.slane %v94, 1
    %v96 = vadd.f32 %v94, %v95
    %v97 = vmul.f32 %v96, %v13
    %vm98 = vcmask 256002
    %v99 = vsel %vm98, %v97, 0.0
    %100 = vadd.xlane.f32.xlu0 %v99
    %v101 = vpop.xlane.xlu0 %100
    %vm102 = vcmask 15368
    %v103 = vsel %vm102, %v12, 0.0
    %v104 = vrot.slane %v103, 4
    %v105 = vadd.f32 %v103, %v104
    %v106 = vrot.slane %v105, 2
    %v107 = vadd.f32 %v105, %v106
    %v108 = vrot.slane %v107, 1
    %v109 = vadd.f32 %v107, %v108
    %111 = vrot.lane.b32.xlu0 %v109, 127
    %v112 = vpop.permute.xlu0 %111
    %v114 = vmul.f32 %v13, %v112
    %116 = vrot.lane.b32.xlu0 %v13, 127
    %v117 = vpop.permute.xlu0 %116
    %v119 = vadd.f32 %v114, %v117
    %v121 = vrot.slane %v119, 1
    %v123 = vadd.f32 %v101, %v121
    %vm124 = vcmask 2050
    %125 = vst.msk [vmem:[#allocation2 - $0x2] sm:$0x4] %vm124, %v123
    // Predicated region
    $region10: #{wasserstein_forward.1} parent=1 // pred_check
      _
    $region11: #{wasserstein_forward.1} parent=1 // pred_check_branch
      %127 = sbr.rel (0) target = $region13
    $region12: #{wasserstein_forward.1} parent=1 // pred_region
      %129 = vsyncadd [#allocation3], 0
      %s131 = sshll.u32 [#allocation2], 4
      %s132 = int_to_ptr.vmem [resolvable:$true] %s131
      %s133 = sshll.u32 %s2, 4
      %s134 = int_to_ptr.hbm [resolvable:$true] %s133
      %136 = dma.vmem_to_hbm [thread:$0]  %s132, 16, %s134, [#allocation3]
    $region13: #{wasserstein_forward.1} parent=1 // pred_fallthru
      _
    // Predicated region
    $region14: #{wasserstein_forward.1} parent=1 // pred_check
      _
    $region15: #{wasserstein_forward.1} parent=1 // pred_check_branch
      %138 = sbr.rel (0) target = $region17
    $region16: #{wasserstein_forward.1} parent=1 // pred_region
      %140 = dma.done [#allocation3], 16
    $region17: #{wasserstein_forward.1} parent=1 // pred_fallthru
      _
    %141 = vsyncpa [#allocation3], 1

</llo_original>
